<compile_context>
chip_gen: v7x
topology: tpu7x:2x2x1
jax: 0.10.0
libtpu: 0.0.40
codegen_flags: <defaults>
</compile_context>

<pallas_src>
import jax
import jax.numpy as jnp
from jax.experimental import pallas as pl
from jax.experimental.pallas import tpu as pltpu


_LANE = 128
_SUBLANE = 16                        # satisfies both f32 (8) and bf16 (16) sublane tiling
_VMEM_BUDGET = 48 * 1024 * 1024      # conservative: fits v7x's 64 MiB VMEM with headroom
_W1_SLAB_BYTES = 8 * 1024 * 1024     # per-buffer budget for the streamed w1 K-slabs


def _round_up(x, m):
    return ((x + m - 1) // m) * m


def _pad2d(a, rows, cols):
    pr, pc = rows - a.shape[0], cols - a.shape[1]
    if pr or pc:
        a = jnp.pad(a, ((0, pr), (0, pc)))
    return a


def mlp_kernel(x_ref, w1_ref, b1_ref, w2_ref, b2_ref, o_ref, h_acc):
    """One (tm x tk) fc1 accumulation step; ReLU + fc2 on the last k step."""
    k = pl.program_id(1)

    @pl.when(k == 0)
    def _init():
        # Fold the fc1 bias into the accumulator up front (broadcast over rows).
        h_acc[...] = jnp.broadcast_to(
            b1_ref[...].astype(jnp.float32), h_acc.shape)

    # fc1 partial product: [tm, tk] @ [tk, hid], f32 accumulation on the MXU.
    h_acc[...] += jnp.dot(x_ref[...], w1_ref[...],
                          preferred_element_type=jnp.float32)

    @pl.when(k == pl.num_programs(1) - 1)
    def _finish():
        # ReLU on the f32 accumulator (dropout p=0.0 is the identity).
        h = jnp.maximum(h_acc[...], 0.0)
        # fc2: [tm, hid] @ [hid, out] + bias, f32 accumulation, cast at the end.
        o = jnp.dot(h.astype(w2_ref.dtype), w2_ref[...],
                    preferred_element_type=jnp.float32)
        o_ref[...] = (o + b2_ref[...].astype(jnp.float32)).astype(o_ref.dtype)


def _choose_tiles(M, in_p0, hid_p, out_p, x_bytes, w_bytes, o_bytes):
    # K (in_features) tile: stream w1 in (tk, hid_p) slabs (double buffered).
    tk = (_W1_SLAB_BYTES // (2 * hid_p * w_bytes)) // _LANE * _LANE
    tk = int(max(_LANE, min(in_p0, tk)))

    # M tile against the VMEM budget (worst case: all weights double buffered,
    # so the fallback-buffering path is guaranteed to fit as well).
    fixed = (2 * tk * hid_p * w_bytes            # streamed w1 slabs
             + 2 * hid_p * out_p * w_bytes       # w2
             + 2 * (hid_p + out_p) * w_bytes)    # biases
    per_row = (2 * tk * x_bytes                  # x tile (double buffered)
               + 2 * out_p * o_bytes             # out tile (double buffered)
               + hid_p * 4)                      # f32 fc1 accumulator scratch
    tm = ((_VMEM_BUDGET - fixed) // per_row) // _SUBLANE * _SUBLANE
    tm = max(_SUBLANE, min(1024, tm))
    # Prefer >=2 M-steps when possible (megacore sharding on v7x, pipelining).
    tm = min(tm, max(_SUBLANE, _round_up(pl.cdiv(M, 2), _SUBLANE)))
    tm = min(tm, _round_up(M, _SUBLANE))
    return int(tm), int(tk)


def _build_mlp_call(M_p, in_p, hid_p, out_p, tm, tk, out_dtype,
                    single_buffer_weights, flops, bytes_accessed, vmem_limit):
    if single_buffer_weights:
        # Constant-index blocks: a single VMEM copy is enough (halves residency).
        wmode = dict(pipeline_mode=pl.Buffered(1))
    else:
        wmode = {}

    grid = (M_p // tm, in_p // tk)

    return pl.pallas_call(
        mlp_kernel,
        out_shape=jax.ShapeDtypeStruct((M_p, out_p), out_dtype),
        grid_spec=pltpu.PrefetchScalarGridSpec(
            num_scalar_prefetch=0,
            grid=grid,
            in_specs=[
                pl.BlockSpec((tm, tk), lambda i, k: (i, k)),                 # x tile
                pl.BlockSpec((tk, hid_p), lambda i, k: (k, 0)),              # w1 K-slab
                pl.BlockSpec((1, hid_p), lambda i, k: (0, 0), **wmode),      # b1
                pl.BlockSpec((hid_p, out_p), lambda i, k: (0, 0), **wmode),  # w2
                pl.BlockSpec((1, out_p), lambda i, k: (0, 0), **wmode),      # b2
            ],
            out_specs=pl.BlockSpec((tm, out_p), lambda i, k: (i, 0)),
            scratch_shapes=[pltpu.VMEM((tm, hid_p), jnp.float32)],           # fc1 acc
        ),
        compiler_params=pltpu.CompilerParams(
            dimension_semantics=("parallel", "arbitrary"),
            vmem_limit_bytes=vmem_limit),
        cost_estimate=pl.CostEstimate(
            flops=flops, transcendentals=0, bytes_accessed=bytes_accessed),
    )


def mlp_pallas(x2d, w1, b1, w2, b2):
    """x2d: [M, in_f]; w1: [in_f, hid]; w2: [hid, out]; returns [M, out]."""
    M, in_f = x2d.shape
    hid = w1.shape[1]
    out_f = w2.shape[1]

    hid_p = max(_LANE, _round_up(hid, _LANE))
    out_p = max(_LANE, _round_up(out_f, _LANE))
    in_p0 = max(_LANE, _round_up(in_f, _LANE))

    x_bytes = x2d.dtype.itemsize
    w_bytes = w1.dtype.itemsize
    o_bytes = x_bytes

    tm, tk = _choose_tiles(M, in_p0, hid_p, out_p, x_bytes, w_bytes, o_bytes)
    in_p = _round_up(in_p0, tk)      # every K block must be full (zero padded)
    M_p = _round_up(M, tm)           # every M block must be full (zero padded)

    # Zero padding is exact: padded x cols / w1 rows / hid cols contribute 0
    # through the matmuls, and padded output cols are sliced off at the end.
    x_p = _pad2d(x2d, M_p, in_p)
    w1_p = _pad2d(w1, in_p, hid_p)
    b1_p = _pad2d(b1.reshape(1, -1), 1, hid_p)
    w2_p = _pad2d(w2, hid_p, out_p)
    b2_p = _pad2d(b2.reshape(1, -1), 1, out_p)

    # Advisory cost for XLA's scheduler around the custom call.
    flops = 2 * M_p * in_p * hid_p + 2 * M_p * hid_p * out_p
    bytes_accessed = (x_p.size * x_bytes
                      + (w1_p.size + w2_p.size + b1_p.size + b2_p.size) * w_bytes
                      + M_p * out_p * o_bytes)

    # Scoped VMEM limit sized to worst-case (double buffered) usage.
    est = (2 * tm * tk * x_bytes + 2 * tk * hid_p * w_bytes
           + 2 * hid_p * out_p * w_bytes + 2 * (hid_p + out_p) * w_bytes
           + 2 * tm * out_p * o_bytes + tm * hid_p * 4)
    vmem_limit = int(min(60 * 2**20, max(32 * 2**20, est * 3 // 2)))

    args = (x_p, w1_p, b1_p, w2_p, b2_p)
    try:
        call = _build_mlp_call(M_p, in_p, hid_p, out_p, tm, tk, x2d.dtype,
                               True, flops, bytes_accessed, vmem_limit)
        y_p = call(*args)
    except Exception:
        # pl.Buffered(1) not supported on this jax/libtpu build -> default buffering.
        call = _build_mlp_call(M_p, in_p, hid_p, out_p, tm, tk, x2d.dtype,
                               False, flops, bytes_accessed, vmem_limit)
        y_p = call(*args)

    return y_p[:M, :out_f]


def mlp_forward(x, w1, b1, w2, b2):
    """x: [..., in_features] -> [..., out_features]."""
    lead = x.shape[:-1]
    x2d = x.reshape(-1, x.shape[-1])
    y2d = mlp_pallas(x2d, w1, b1, w2, b2)
    return y2d.reshape(*lead, w2.shape[1])


def init_linear_params(key, fan_in, fan_out, dtype=jnp.float32):
    # Mimics torch.nn.Linear default init: uniform in +/- 1/sqrt(fan_in).
    kw, kb = jax.random.split(key)
    bound = 1.0 / jnp.sqrt(jnp.asarray(fan_in, dtype))
    w = jax.random.uniform(kw, (fan_in, fan_out), dtype, -bound, bound)
    b = jax.random.uniform(kb, (fan_out,), dtype, -bound, bound)
    return w, b


if __name__ == "__main__":
    key = jax.random.PRNGKey(0)
    k_x, k_fc1, k_fc2 = jax.random.split(key, 3)

    batch, seq = 2, 8
    in_features = 32
    hidden_features = in_features // 4   # module default: in_features // 4
    out_features = in_features           # module default: out_features = in_features

    x = jax.random.normal(k_x, (batch, seq, in_features), jnp.float32)
    w1, b1 = init_linear_params(k_fc1, in_features, hidden_features)
    w2, b2 = init_linear_params(k_fc2, hidden_features, out_features)

    # f32 run + tight pure-JAX reference check.
    y = jax.block_until_ready(mlp_forward(x, w1, b1, w2, b2))
    y_ref = jnp.maximum(x @ w1 + b1, 0.0) @ w2 + b2
    assert y.shape == (batch, seq, out_features)
    assert jnp.allclose(y, y_ref, atol=1e-4, rtol=1e-4), \
        float(jnp.max(jnp.abs(y - y_ref)))

    # bf16 storage + f32 accumulation (recommended deployment dtype).
    bf = lambda a: a.astype(jnp.bfloat16)
    y_bf16 = jax.block_until_ready(
        mlp_forward(bf(x), bf(w1), bf(b1), bf(w2), bf(b2)))
    f32 = lambda a: bf(a).astype(jnp.float32)
    ref_bf16 = jnp.maximum(f32(x) @ f32(w1) + f32(b1), 0.0) @ f32(w2) + f32(b2)
    assert y_bf16.dtype == jnp.bfloat16
    assert jnp.allclose(y_bf16.astype(jnp.float32), ref_bf16, atol=0.1, rtol=0.1)

    print("KERNEL_OK")
</pallas_src>

<mosaic_0001>
module attributes {stable_mosaic.version = 11 : i64} {
  func.func @mlp_kernel(%arg0: i32, %arg1: i32, %arg2: memref<16x128xf32, #tpu.memory_space<vmem>>, %arg3: memref<128x128xf32, #tpu.memory_space<vmem>>, %arg4: memref<1x128xf32, #tpu.memory_space<vmem>>, %arg5: memref<128x128xf32, #tpu.memory_space<vmem>>, %arg6: memref<1x128xf32, #tpu.memory_space<vmem>>, %arg7: memref<16x128xf32, #tpu.memory_space<vmem>>, %arg8: memref<16x128xf32, #tpu.memory_space<vmem>>) attributes {dimension_semantics = [#tpu.dimension_semantics<parallel>, #tpu.dimension_semantics<arbitrary>], iteration_bounds = array<i64: 1, 1>, scalar_prefetch = 0 : i64, scratch_operands = 1 : i64, tpu.core_type = #tpu.core_type<tc>, window_params = [{transform_indices = @transform_0, window_bounds = array<i64: 16, 128>}, {transform_indices = @transform_1, window_bounds = array<i64: 128, 128>}, {pipeline_mode = #tpu.pipeline_mode<synchronous>, transform_indices = @transform_2, window_bounds = array<i64: 1, 128>}, {pipeline_mode = #tpu.pipeline_mode<synchronous>, transform_indices = @transform_3, window_bounds = array<i64: 128, 128>}, {pipeline_mode = #tpu.pipeline_mode<synchronous>, transform_indices = @transform_4, window_bounds = array<i64: 1, 128>}, {transform_indices = @transform_5, window_bounds = array<i64: 16, 128>}]} {
    %c0_i32 = arith.constant 0 : i32
    %0 = arith.cmpi eq, %arg1, %c0_i32 : i32
    %1 = arith.extui %0 : i1 to i32
    %c0_i32_0 = arith.constant 0 : i32
    %2 = arith.cmpi ne, %1, %c0_i32_0 : i32
    scf.if %2 {
      %c0_10 = arith.constant 0 : index
      %c0_11 = arith.constant 0 : index
      %12 = vector.load %arg4[%c0_10, %c0_11] : memref<1x128xf32, #tpu.memory_space<vmem>>, vector<1x128xf32>
      %13 = vector.shape_cast %12 : vector<1x128xf32> to vector<1x128xf32>
      %14 = vector.broadcast %13 : vector<1x128xf32> to vector<16x128xf32>
      %c0_12 = arith.constant 0 : index
      %c0_13 = arith.constant 0 : index
      %15 = vector.load %arg8[%c0_12, %c0_13] : memref<16x128xf32, #tpu.memory_space<vmem>>, vector<16x128xf32>
      tpu.vector_store %arg8[%c0_12, %c0_13], %14 {strides = array<i32>} : memref<16x128xf32, #tpu.memory_space<vmem>>, vector<16x128xf32>,
    } else {
    }
    %c0 = arith.constant 0 : index
    %c0_1 = arith.constant 0 : index
    %3 = vector.load %arg8[%c0, %c0_1] : memref<16x128xf32, #tpu.memory_space<vmem>>, vector<16x128xf32>
    %c0_2 = arith.constant 0 : index
    %c0_3 = arith.constant 0 : index
    %4 = vector.load %arg2[%c0_2, %c0_3] : memref<16x128xf32, #tpu.memory_space<vmem>>, vector<16x128xf32>
    %c0_4 = arith.constant 0 : index
    %c0_5 = arith.constant 0 : index
    %5 = vector.load %arg3[%c0_4, %c0_5] : memref<128x128xf32, #tpu.memory_space<vmem>>, vector<128x128xf32>
    %cst = arith.constant dense<0.000000e+00> : vector<16x128xf32>
    %6 = tpu.matmul %4, %5, %cst {dimension_numbers = #tpu.dot_dimension_numbers<[1], [0], [0], [1], [0, 0, 1, 1], [], []>} : vector<16x128xf32>, vector<128x128xf32>, vector<16x128xf32> -> vector<16x128xf32>
    %7 = arith.addf %3, %6 : vector<16x128xf32>
    %c0_6 = arith.constant 0 : index
    %c0_7 = arith.constant 0 : index
    %8 = vector.load %arg8[%c0_6, %c0_7] : memref<16x128xf32, #tpu.memory_space<vmem>>, vector<16x128xf32>
    tpu.vector_store %arg8[%c0_6, %c0_7], %7 {strides = array<i32>} : memref<16x128xf32, #tpu.memory_space<vmem>>, vector<16x128xf32>,
    %c0_i32_8 = arith.constant 0 : i32
    %9 = arith.cmpi eq, %arg1, %c0_i32_8 : i32
    %10 = arith.extui %9 : i1 to i32
    %c0_i32_9 = arith.constant 0 : i32
    %11 = arith.cmpi ne, %10, %c0_i32_9 : i32
    scf.if %11 {
      %c0_10 = arith.constant 0 : index
      %c0_11 = arith.constant 0 : index
      %12 = vector.load %arg8[%c0_10, %c0_11] : memref<16x128xf32, #tpu.memory_space<vmem>>, vector<16x128xf32>
      %cst_12 = arith.constant 0.000000e+00 : f32
      %13 = vector.broadcast %cst_12 : f32 to vector<16x128xf32>
      %14 = arith.maximumf %12, %13 : vector<16x128xf32>
      %c0_13 = arith.constant 0 : index
      %c0_14 = arith.constant 0 : index
      %15 = vector.load %arg5[%c0_13, %c0_14] : memref<128x128xf32, #tpu.memory_space<vmem>>, vector<128x128xf32>
      %cst_15 = arith.constant dense<0.000000e+00> : vector<16x128xf32>
      %16 = tpu.matmul %14, %15, %cst_15 {dimension_numbers = #tpu.dot_dimension_numbers<[1], [0], [0], [1], [0, 0, 1, 1], [], []>} : vector<16x128xf32>, vector<128x128xf32>, vector<16x128xf32> -> vector<16x128xf32>
      %c0_16 = arith.constant 0 : index
      %c0_17 = arith.constant 0 : index
      %17 = vector.load %arg6[%c0_16, %c0_17] : memref<1x128xf32, #tpu.memory_space<vmem>>, vector<1x128xf32>
      %18 = vector.broadcast %17 : vector<1x128xf32> to vector<16x128xf32>
      %19 = arith.addf %16, %18 : vector<16x128xf32>
      %c0_18 = arith.constant 0 : index
      %c0_19 = arith.constant 0 : index
      %20 = vector.load %arg7[%c0_18, %c0_19] : memref<16x128xf32, #tpu.memory_space<vmem>>, vector<16x128xf32>
      tpu.vector_store %arg7[%c0_18, %c0_19], %19 {strides = array<i32>} : memref<16x128xf32, #tpu.memory_space<vmem>>, vector<16x128xf32>,
    } else {
    }
    return
  }
  func.func @transform_0(%arg0: i32, %arg1: i32) -> (i32, i32) {
    %c0_i32 = arith.constant 0 : i32
    return %arg0, %arg1 : i32, i32
  }
  func.func @transform_1(%arg0: i32, %arg1: i32) -> (i32, i32) {
    %c0_i32 = arith.constant 0 : i32
    %c0_i32_0 = arith.constant 0 : i32
    return %arg1, %c0_i32 : i32, i32
  }
  func.func @transform_2(%arg0: i32, %arg1: i32) -> (i32, i32) {
    %c0_i32 = arith.constant 0 : i32
    %c0_i32_0 = arith.constant 0 : i32
    %c0_i32_1 = arith.constant 0 : i32
    return %c0_i32, %c0_i32_0 : i32, i32
  }
  func.func @transform_3(%arg0: i32, %arg1: i32) -> (i32, i32) {
    %c0_i32 = arith.constant 0 : i32
    %c0_i32_0 = arith.constant 0 : i32
    %c0_i32_1 = arith.constant 0 : i32
    return %c0_i32, %c0_i32_0 : i32, i32
  }
  func.func @transform_4(%arg0: i32, %arg1: i32) -> (i32, i32) {
    %c0_i32 = arith.constant 0 : i32
    %c0_i32_0 = arith.constant 0 : i32
    %c0_i32_1 = arith.constant 0 : i32
    return %c0_i32, %c0_i32_0 : i32, i32
  }
  func.func @transform_5(%arg0: i32, %arg1: i32) -> (i32, i32) {
    %c0_i32 = arith.constant 0 : i32
    %c0_i32_0 = arith.constant 0 : i32
    return %arg0, %c0_i32 : i32, i32
  }
}

module attributes {stable_mosaic.version = 11 : i64} {
  func.func @mlp_kernel(%arg0: i32, %arg1: i32, %arg2: memref<16x128xf32, #tpu.memory_space<vmem>>, %arg3: memref<128x128xf32, #tpu.memory_space<vmem>>, %arg4: memref<1x128xf32, #tpu.memory_space<vmem>>, %arg5: memref<128x128xf32, #tpu.memory_space<vmem>>, %arg6: memref<1x128xf32, #tpu.memory_space<vmem>>, %arg7: memref<16x128xf32, #tpu.memory_space<vmem>>, %arg8: memref<16x128xf32, #tpu.memory_space<vmem>>) attributes {dimension_semantics = [#tpu.dimension_semantics<parallel>, #tpu.dimension_semantics<arbitrary>], iteration_bounds = array<i64: 1, 1>, scalar_prefetch = 0 : i64, scratch_operands = 1 : i64, tpu.core_type = #tpu.core_type<tc>, window_params = [{transform_indices = @transform_0, window_bounds = array<i64: 16, 128>}, {transform_indices = @transform_1, window_bounds = array<i64: 128, 128>}, {pipeline_mode = #tpu.pipeline_mode<synchronous>, transform_indices = @transform_2, window_bounds = array<i64: 1, 128>}, {pipeline_mode = #tpu.pipeline_mode<synchronous>, transform_indices = @transform_3, window_bounds = array<i64: 128, 128>}, {pipeline_mode = #tpu.pipeline_mode<synchronous>, transform_indices = @transform_4, window_bounds = array<i64: 1, 128>}, {transform_indices = @transform_5, window_bounds = array<i64: 16, 128>}]} {
    %c0_i32 = arith.constant 0 : i32
    %0 = arith.cmpi eq, %arg1, %c0_i32 : i32
    %1 = arith.extui %0 : i1 to i32
    %c0_i32_0 = arith.constant 0 : i32
    %2 = arith.cmpi ne, %1, %c0_i32_0 : i32
    scf.if %2 {
      %c0_10 = arith.constant 0 : index
      %c0_11 = arith.constant 0 : index
      %12 = vector.load %arg4[%c0_10, %c0_11] : memref<1x128xf32, #tpu.memory_space<vmem>>, vector<1x128xf32>
      %13 = vector.shape_cast %12 : vector<1x128xf32> to vector<1x128xf32>
      %14 = vector.broadcast %13 : vector<1x128xf32> to vector<16x128xf32>
      %c0_12 = arith.constant 0 : index
      %c0_13 = arith.constant 0 : index
      %15 = vector.load %arg8[%c0_12, %c0_13] : memref<16x128xf32, #tpu.memory_space<vmem>>, vector<16x128xf32>
      tpu.vector_store %arg8[%c0_12, %c0_13], %14 {strides = array<i32>} : memref<16x128xf32, #tpu.memory_space<vmem>>, vector<16x128xf32>,
    } else {
    }
    %c0 = arith.constant 0 : index
    %c0_1 = arith.constant 0 : index
    %3 = vector.load %arg8[%c0, %c0_1] : memref<16x128xf32, #tpu.memory_space<vmem>>, vector<16x128xf32>
    %c0_2 = arith.constant 0 : index
    %c0_3 = arith.constant 0 : index
    %4 = vector.load %arg2[%c0_2, %c0_3] : memref<16x128xf32, #tpu.memory_space<vmem>>, vector<16x128xf32>
    %c0_4 = arith.constant 0 : index
    %c0_5 = arith.constant 0 : index
    %5 = vector.load %arg3[%c0_4, %c0_5] : memref<128x128xf32, #tpu.memory_space<vmem>>, vector<128x128xf32>
    %cst = arith.constant dense<0.000000e+00> : vector<16x128xf32>
    %6 = tpu.matmul %4, %5, %cst {dimension_numbers = #tpu.dot_dimension_numbers<[1], [0], [0], [1], [0, 0, 1, 1], [], []>} : vector<16x128xf32>, vector<128x128xf32>, vector<16x128xf32> -> vector<16x128xf32>
    %7 = arith.addf %3, %6 : vector<16x128xf32>
    %c0_6 = arith.constant 0 : index
    %c0_7 = arith.constant 0 : index
    %8 = vector.load %arg8[%c0_6, %c0_7] : memref<16x128xf32, #tpu.memory_space<vmem>>, vector<16x128xf32>
    tpu.vector_store %arg8[%c0_6, %c0_7], %7 {strides = array<i32>} : memref<16x128xf32, #tpu.memory_space<vmem>>, vector<16x128xf32>,
    %c0_i32_8 = arith.constant 0 : i32
    %9 = arith.cmpi eq, %arg1, %c0_i32_8 : i32
    %10 = arith.extui %9 : i1 to i32
    %c0_i32_9 = arith.constant 0 : i32
    %11 = arith.cmpi ne, %10, %c0_i32_9 : i32
    scf.if %11 {
      %c0_10 = arith.constant 0 : index
      %c0_11 = arith.constant 0 : index
      %12 = vector.load %arg8[%c0_10, %c0_11] : memref<16x128xf32, #tpu.memory_space<vmem>>, vector<16x128xf32>
      %cst_12 = arith.constant 0.000000e+00 : f32
      %13 = vector.broadcast %cst_12 : f32 to vector<16x128xf32>
      %14 = arith.maximumf %12, %13 : vector<16x128xf32>
      %c0_13 = arith.constant 0 : index
      %c0_14 = arith.constant 0 : index
      %15 = vector.load %arg5[%c0_13, %c0_14] : memref<128x128xf32, #tpu.memory_space<vmem>>, vector<128x128xf32>
      %cst_15 = arith.constant dense<0.000000e+00> : vector<16x128xf32>
      %16 = tpu.matmul %14, %15, %cst_15 {dimension_numbers = #tpu.dot_dimension_numbers<[1], [0], [0], [1], [0, 0, 1, 1], [], []>} : vector<16x128xf32>, vector<128x128xf32>, vector<16x128xf32> -> vector<16x128xf32>
      %c0_16 = arith.constant 0 : index
      %c0_17 = arith.constant 0 : index
      %17 = vector.load %arg6[%c0_16, %c0_17] : memref<1x128xf32, #tpu.memory_space<vmem>>, vector<1x128xf32>
      %18 = vector.broadcast %17 : vector<1x128xf32> to vector<16x128xf32>
      %19 = arith.addf %16, %18 : vector<16x128xf32>
      %c0_18 = arith.constant 0 : index
      %c0_19 = arith.constant 0 : index
      %20 = vector.load %arg7[%c0_18, %c0_19] : memref<16x128xf32, #tpu.memory_space<vmem>>, vector<16x128xf32>
      tpu.vector_store %arg7[%c0_18, %c0_19], %19 {strides = array<i32>} : memref<16x128xf32, #tpu.memory_space<vmem>>, vector<16x128xf32>,
    } else {
    }
    return
  }
  func.func @transform_0(%arg0: i32, %arg1: i32) -> (i32, i32) {
    %c0_i32 = arith.constant 0 : i32
    return %arg0, %arg1 : i32, i32
  }
  func.func @transform_1(%arg0: i32, %arg1: i32) -> (i32, i32) {
    %c0_i32 = arith.constant 0 : i32
    %c0_i32_0 = arith.constant 0 : i32
    return %arg1, %c0_i32 : i32, i32
  }
  func.func @transform_2(%arg0: i32, %arg1: i32) -> (i32, i32) {
    %c0_i32 = arith.constant 0 : i32
    %c0_i32_0 = arith.constant 0 : i32
    %c0_i32_1 = arith.constant 0 : i32
    return %c0_i32, %c0_i32_0 : i32, i32
  }
  func.func @transform_3(%arg0: i32, %arg1: i32) -> (i32, i32) {
    %c0_i32 = arith.constant 0 : i32
    %c0_i32_0 = arith.constant 0 : i32
    %c0_i32_1 = arith.constant 0 : i32
    return %c0_i32, %c0_i32_0 : i32, i32
  }
  func.func @transform_4(%arg0: i32, %arg1: i32) -> (i32, i32) {
    %c0_i32 = arith.constant 0 : i32
    %c0_i32_0 = arith.constant 0 : i32
    %c0_i32_1 = arith.constant 0 : i32
    return %c0_i32, %c0_i32_0 : i32, i32
  }
  func.func @transform_5(%arg0: i32, %arg1: i32) -> (i32, i32) {
    %c0_i32 = arith.constant 0 : i32
    %c0_i32_0 = arith.constant 0 : i32
    return %arg0, %c0_i32 : i32, i32
  }
}

</mosaic_0001>

<llo_original>
// kernel: tpu_custom_call.1
$region0: #{tpu_custom_call.1}
  #allocation0 [shape = 'u32[]', space=smem, size = 0x4, offset = 0x4, fixed_abs, tag = 'smem constant byte address 0x4 - core index']
  #allocation1 [shape = 'u32[144,128]{1,0:T(1,128)}', space=vmem, size = 0x12000, scoped, tag = 'internal scratch']
  #allocation2 [shape = 'f32[16,128]{1,0:T(8,128)}', space=vmem, size = 0x2000, scoped, tag = 'scratch operand']
  %s0 = inlined_call_operand.hbm [shape: f32[16,128], index: 0, kind: input, shape index: {}]
  %s1 = inlined_call_operand.hbm [shape: f32[128,128], index: 1, kind: input, shape index: {}]
  %s2 = inlined_call_operand.vmem [shape: f32[1,128], index: 2, kind: input, shape index: {}]
  %s3 = inlined_call_operand.hbm [shape: f32[128,128], index: 3, kind: input, shape index: {}]
  %s4 = inlined_call_operand.vmem [shape: f32[1,128], index: 4, kind: input, shape index: {}]
  %s5 = inlined_call_operand.hbm [shape: f32[16,128], index: 5, kind: output, shape index: {}]
  %s6 = sld [smem:[#allocation0]]
  $region50: #{tpu_custom_call.1} parent=0
    _
  %s8 = ssub.s32 1, %s6
  %s9 = scalar_select 0, %s8, %s6
  $region1: #{tpu_custom_call.1} parent=0
    #allocation3 [shape = 'u8[8192]{0}', space=vmem, size = 0x2000, scoped, tag = 'input window, operand 0, single buffered']
    #allocation4 [shape = 's32[1]{0}', space=sflag, size = 0x4, scoped, tag = 'scoped memory for tpu_custom_call.1']
    #allocation5 [shape = 's32[1]{0}', space=sflag, size = 0x4, scoped, tag = 'scoped memory for tpu_custom_call.1']
    #allocation6 [shape = 'u8[65536]{0}', space=vmem, size = 0x10000, scoped, tag = 'input window, operand 1, single buffered']
    #allocation7 [shape = 's32[1]{0}', space=sflag, size = 0x4, scoped, tag = 'scoped memory for tpu_custom_call.1']
    #allocation8 [shape = 'u8[65536]{0}', space=vmem, size = 0x10000, scoped, tag = 'input window, operand 3, single buffered']
    #allocation9 [shape = 'u8[8192]{0}', space=vmem, size = 0x2000, scoped, tag = 'output window, operand 0, single buffered']
    %10 = vsyncpa [#allocation4], 0
    %11 = vsyncpa [#allocation7], 0
    %12 = vsyncpa [#allocation5], 0
    // Predicated region
    $region2: #{tpu_custom_call.1} parent=1 // pred_check
      _
    $region3: #{tpu_custom_call.1} parent=1 // pred_check_branch
      %14 = sbr.rel (0) target = $region5
    $region4: #{tpu_custom_call.1} parent=1 // pred_region
      %s16 = ssub.s32 256, 256
      %17 = vsyncadd [#allocation4], %s16
      %s18 = sshll.u32 [#allocation3], 4
      %s19 = int_to_ptr.vmem [resolvable:$true] %s18
      %24 = dma.hbm_to_vmem [thread:$0]  %s0, 256, %s19, [#allocation4], 128, 128, 8
    $region5: #{tpu_custom_call.1} parent=1 // pred_fallthru
      _
    // Predicated region
    $region6: #{tpu_custom_call.1} parent=1 // pred_check
      _
    $region7: #{tpu_custom_call.1} parent=1 // pred_check_branch
      %26 = sbr.rel (0) target = $region9
    $region8: #{tpu_custom_call.1} parent=1 // pred_region
      %s28 = ssub.s32 2048, 2048
      %29 = vsyncadd [#allocation7], %s28
      %s30 = sshll.u32 [#allocation6], 4
      %s31 = int_to_ptr.vmem [resolvable:$true] %s30
      %36 = dma.hbm_to_vmem [thread:$0]  %s1, 2048, %s31, [#allocation7], 128, 128, 8
    $region9: #{tpu_custom_call.1} parent=1 // pred_fallthru
      _
    // Predicated region
    $region10: #{tpu_custom_call.1} parent=1 // pred_check
      _
    $region11: #{tpu_custom_call.1} parent=1 // pred_check_branch
      %38 = sbr.rel (0) target = $region13
    $region12: #{tpu_custom_call.1} parent=1 // pred_region
      _
    $region13: #{tpu_custom_call.1} parent=1 // pred_fallthru
      _
    // Predicated region
    $region14: #{tpu_custom_call.1} parent=1 // pred_check
      _
    $region15: #{tpu_custom_call.1} parent=1 // pred_check_branch
      %40 = sbr.rel (0) target = $region17
    $region16: #{tpu_custom_call.1} parent=1 // pred_region
      %s42 = ssub.s32 2048, 2048
      %43 = vsyncadd [#allocation7], %s42
      %s44 = sshll.u32 [#allocation8], 4
      %s45 = int_to_ptr.vmem [resolvable:$true] %s44
      %50 = dma.hbm_to_vmem [thread:$0]  %s3, 2048, %s45, [#allocation7], 128, 128, 8
    $region17: #{tpu_custom_call.1} parent=1 // pred_fallthru
      _
    // Predicated region
    $region18: #{tpu_custom_call.1} parent=1 // pred_check
      _
    $region19: #{tpu_custom_call.1} parent=1 // pred_check_branch
      %52 = sbr.rel (0) target = $region21
    $region20: #{tpu_custom_call.1} parent=1 // pred_region
      _
    $region21: #{tpu_custom_call.1} parent=1 // pred_fallthru
      _
    // Predicated region
    $region22: #{tpu_custom_call.1} parent=1 // pred_check
      _
    $region23: #{tpu_custom_call.1} parent=1 // pred_check_branch
      %54 = sbr.rel (0) target = $region25
    $region24: #{tpu_custom_call.1} parent=1 // pred_region
      %55 = dma.done [#allocation4], 256
    $region25: #{tpu_custom_call.1} parent=1 // pred_fallthru
      _
    // Predicated region
    $region26: #{tpu_custom_call.1} parent=1 // pred_check
      _
    $region27: #{tpu_custom_call.1} parent=1 // pred_check_branch
      %57 = sbr.rel (0) target = $region29
    $region28: #{tpu_custom_call.1} parent=1 // pred_region
      %58 = dma.done [#allocation7], 2048
    $region29: #{tpu_custom_call.1} parent=1 // pred_fallthru
      _
    // Predicated region
    $region30: #{tpu_custom_call.1} parent=1 // pred_check
      _
    $region31: #{tpu_custom_call.1} parent=1 // pred_check_branch
      %60 = sbr.rel (0) target = $region33
    $region32: #{tpu_custom_call.1} parent=1 // pred_region
      %61 = dma.done [#allocation7], 2048
    $region33: #{tpu_custom_call.1} parent=1 // pred_fallthru
      _
    %p62 = scmp.eq.s32.totalorder 0, 0
    // Predicated region
    $region34: #{tpu_custom_call.1} parent=1 // pred_check
      %p63 = pneg %p62
    $region35: #{tpu_custom_call.1} parent=1 // pred_check_branch
      %65 = sbr.rel (%p63) target = $region37
    $region36: #{tpu_custom_call.1} parent=1 // pred_region
      %v66 = vld [vmem:[%s2] sm:$0x1]
      %v68 = vlaneseq
      %v69 = vshrl.u32 %v68, 7
      %v70 = vsub.s32 0, %v69
      %v71 = vrot.slane %v66, %v70
      %73 = vst [vmem:[#allocation2] sm:$0xff] %v71
      %74 = vst [vmem:[#allocation2 + $0x8] sm:$0xff] %v71
    $region37: #{tpu_custom_call.1} parent=1 // pred_fallthru
      _
    %v75 = vld [vmem:[#allocation2] sm:$0xff]
    %v76 = vld [vmem:[#allocation2 + $0x8] sm:$0xff]
    %v77 = vld [vmem:[#allocation3] sm:$0xff]
    %v78 = vld [vmem:[#allocation3 + $0x8] sm:$0xff]
    %v79 = vld [vmem:[#allocation6] sm:$0xff]
    %v80 = vld [vmem:[#allocation6 + $0x8] sm:$0xff]
    %v81 = vld [vmem:[#allocation6 + $0x10] sm:$0xff]
    %v82 = vld [vmem:[#allocation6 + $0x18] sm:$0xff]
    %v83 = vld [vmem:[#allocation6 + $0x20] sm:$0xff]
    %v84 = vld [vmem:[#allocation6 + $0x28] sm:$0xff]
    %v85 = vld [vmem:[#allocation6 + $0x30] sm:$0xff]
    %v86 = vld [vmem:[#allocation6 + $0x38] sm:$0xff]
    %v87 = vld [vmem:[#allocation6 + $0x40] sm:$0xff]
    %v88 = vld [vmem:[#allocation6 + $0x48] sm:$0xff]
    %v89 = vld [vmem:[#allocation6 + $0x50] sm:$0xff]
    %v90 = vld [vmem:[#allocation6 + $0x58] sm:$0xff]
    %v91 = vld [vmem:[#allocation6 + $0x60] sm:$0xff]
    %v92 = vld [vmem:[#allocation6 + $0x68] sm:$0xff]
    %v93 = vld [vmem:[#allocation6 + $0x70] sm:$0xff]
    %v94 = vld [vmem:[#allocation6 + $0x78] sm:$0xff]
    %95 = vmatprep.subr.mxu0 0.0
    %96 = vmatpush1.msra.mxu0 %v79
    %97 = vmatprep.subr.mxu0 0.0
    %98 = vmatpush1.msra.mxu0 %v80
    %99 = vmatprep.subr.mxu0 0.0
    %100 = vmatpush1.msra.mxu0 %v81
    %101 = vmatprep.subr.mxu0 0.0
    %102 = vmatpush1.msra.mxu0 %v82
    %103 = vmatprep.subr.mxu0 0.0
    %104 = vmatpush1.msra.mxu0 %v83
    %105 = vmatprep.subr.mxu0 0.0
    %106 = vmatpush1.msra.mxu0 %v84
    %107 = vmatprep.subr.mxu0 0.0
    %108 = vmatpush1.msra.mxu0 %v85
    %109 = vmatprep.subr.mxu0 0.0
    %110 = vmatpush1.msra.mxu0 %v86
    %111 = vmatprep.subr.mxu0 0.0
    %112 = vmatpush1.msra.mxu0 %v87
    %113 = vmatprep.subr.mxu0 0.0
    %114 = vmatpush1.msra.mxu0 %v88
    %115 = vmatprep.subr.mxu0 0.0
    %116 = vmatpush1.msra.mxu0 %v89
    %117 = vmatprep.subr.mxu0 0.0
    %118 = vmatpush1.msra.mxu0 %v90
    %119 = vmatprep.subr.mxu0 0.0
    %120 = vmatpush1.msra.mxu0 %v91
    %121 = vmatprep.subr.mxu0 0.0
    %122 = vmatpush1.msra.mxu0 %v92
    %123 = vmatprep.subr.mxu0 0.0
    %124 = vmatpush1.msra.mxu0 %v93
    %125 = vmatprep.subr.mxu0 0.0
    %126 = vmatpush1.msra.mxu0 %v94
    %127 = vmatprep.subr.mxu0 0.0
    %128 = vmatpush1.msra.mxu0 0.0
    %129 = vmatprep.subr.mxu0 0.0
    %130 = vmatpush1.msra.mxu0 0.0
    %131 = vmatprep.subr.mxu0 0.0
    %132 = vmatpush1.msra.mxu0 0.0
    %133 = vmatprep.subr.mxu0 0.0
    %134 = vmatpush1.msra.mxu0 0.0
    %135 = vmatprep.subr.mxu0 0.0
    %136 = vmatpush1.msra.mxu0 0.0
    %137 = vmatprep.subr.mxu0 0.0
    %138 = vmatpush1.msra.mxu0 0.0
    %139 = vmatprep.subr.mxu0 0.0
    %140 = vmatpush1.msra.mxu0 0.0
    %141 = vmatprep.subr.mxu0 0.0
    %142 = vmatpush1.msra.mxu0 0.0
    %143 = vmatprep.subr.mxu0 0.0
    %144 = vmatpush1.msra.mxu0 0.0
    %145 = vmatprep.subr.mxu0 0.0
    %146 = vmatpush1.msra.mxu0 0.0
    %147 = vmatprep.subr.mxu0 0.0
    %148 = vmatpush1.msra.mxu0 0.0
    %149 = vmatprep.subr.mxu0 0.0
    %150 = vmatpush1.msra.mxu0 0.0
    %151 = vmatprep.subr.mxu0 0.0
    %152 = vmatpush1.msra.mxu0 0.0
    %153 = vmatprep.subr.mxu0 0.0
    %154 = vmatpush1.msra.mxu0 0.0
    %155 = vmatprep.subr.mxu0 0.0
    %156 = vmatpush1.msra.mxu0 0.0
    %157 = vmatprep.subr.mxu0 0.0
    %158 = vmatpush1.msra.mxu0 0.0
    %159 = vmatprep.mubr.f32.mxu0 0.0
    %160 = vmatmul.mubr.f32.gmra.mrb[0].mxu0 %v77
    %v161 = vpop.f32.mrb[0].mxu0
    %v162 = vadd.f32 0.0, %v161
    %v163 = vpop.f32.mrb[0].mxu0
    %164 = vmatprep.mubr.f32.mxu0 0.0
    %165 = vmatmul.mubr.f32.gmra.mrb[0].mxu0 %v78
    %v166 = vpop.f32.mrb[0].mxu0
    %v167 = vadd.f32 0.0, %v166
    %v168 = vpop.f32.mrb[0].mxu0
    %169 = vdwg.mxu0
    %v170 = vadd.f32 %v75, %v162
    %v171 = vadd.f32 %v76, %v167
    %172 = vst [vmem:[#allocation2] sm:$0xff] %v170
    %173 = vst [vmem:[#allocation2 + $0x8] sm:$0xff] %v171
    // Predicated region
    $region38: #{tpu_custom_call.1} parent=1 // pred_check
      %p174 = pneg %p62
    $region39: #{tpu_custom_call.1} parent=1 // pred_check_branch
      %176 = sbr.rel (%p174) target = $region41
    $region40: #{tpu_custom_call.1} parent=1 // pred_region
      %v177 = vld [vmem:[#allocation2] sm:$0xff]
      %v178 = vld [vmem:[#allocation2 + $0x8] sm:$0xff]
      %v179 = vmax.f32 %v177, 0.0
      %v180 = vmax.f32 %v178, 0.0
      %v181 = vld [vmem:[#allocation8] sm:$0xff]
      %v182 = vld [vmem:[#allocation8 + $0x8] sm:$0xff]
      %v183 = vld [vmem:[#allocation8 + $0x10] sm:$0xff]
      %v184 = vld [vmem:[#allocation8 + $0x18] sm:$0xff]
      %v185 = vld [vmem:[#allocation8 + $0x20] sm:$0xff]
      %v186 = vld [vmem:[#allocation8 + $0x28] sm:$0xff]
      %v187 = vld [vmem:[#allocation8 + $0x30] sm:$0xff]
      %v188 = vld [vmem:[#allocation8 + $0x38] sm:$0xff]
      %v189 = vld [vmem:[#allocation8 + $0x40] sm:$0xff]
      %v190 = vld [vmem:[#allocation8 + $0x48] sm:$0xff]
      %v191 = vld [vmem:[#allocation8 + $0x50] sm:$0xff]
      %v192 = vld [vmem:[#allocation8 + $0x58] sm:$0xff]
      %v193 = vld [vmem:[#allocation8 + $0x60] sm:$0xff]
      %v194 = vld [vmem:[#allocation8 + $0x68] sm:$0xff]
      %v195 = vld [vmem:[#allocation8 + $0x70] sm:$0xff]
      %v196 = vld [vmem:[#allocation8 + $0x78] sm:$0xff]
      %v197 = vld [vmem:[%s4] sm:$0x1]
      %v199 = vlaneseq
      %v200 = vshrl.u32 %v199, 7
      %v201 = vsub.s32 0, %v200
      %v202 = vrot.slane %v197, %v201
      %204 = vmatprep.subr.mxu0 0.0
      %205 = vmatpush1.msra.mxu0 %v181
      %206 = vmatprep.subr.mxu0 0.0
      %207 = vmatpush1.msra.mxu0 %v182
      %208 = vmatprep.subr.mxu0 0.0
      %209 = vmatpush1.msra.mxu0 %v183
      %210 = vmatprep.subr.mxu0 0.0
      %211 = vmatpush1.msra.mxu0 %v184
      %212 = vmatprep.subr.mxu0 0.0
      %213 = vmatpush1.msra.mxu0 %v185
      %214 = vmatprep.subr.mxu0 0.0
      %215 = vmatpush1.msra.mxu0 %v186
      %216 = vmatprep.subr.mxu0 0.0
      %217 = vmatpush1.msra.mxu0 %v187
      %218 = vmatprep.subr.mxu0 0.0
      %219 = vmatpush1.msra.mxu0 %v188
      %220 = vmatprep.subr.mxu0 0.0
      %221 = vmatpush1.msra.mxu0 %v189
      %222 = vmatprep.subr.mxu0 0.0
      %223 = vmatpush1.msra.mxu0 %v190
      %224 = vmatprep.subr.mxu0 0.0
      %225 = vmatpush1.msra.mxu0 %v191
      %226 = vmatprep.subr.mxu0 0.0
      %227 = vmatpush1.msra.mxu0 %v192
      %228 = vmatprep.subr.mxu0 0.0
      %229 = vmatpush1.msra.mxu0 %v193
      %230 = vmatprep.subr.mxu0 0.0
      %231 = vmatpush1.msra.mxu0 %v194
      %232 = vmatprep.subr.mxu0 0.0
      %233 = vmatpush1.msra.mxu0 %v195
      %234 = vmatprep.subr.mxu0 0.0
      %235 = vmatpush1.msra.mxu0 %v196
      %236 = vmatprep.subr.mxu0 0.0
      %237 = vmatpush1.msra.mxu0 0.0
      %238 = vmatprep.subr.mxu0 0.0
      %239 = vmatpush1.msra.mxu0 0.0
      %240 = vmatprep.subr.mxu0 0.0
      %241 = vmatpush1.msra.mxu0 0.0
      %242 = vmatprep.subr.mxu0 0.0
      %243 = vmatpush1.msra.mxu0 0.0
      %244 = vmatprep.subr.mxu0 0.0
      %245 = vmatpush1.msra.mxu0 0.0
      %246 = vmatprep.subr.mxu0 0.0
      %247 = vmatpush1.msra.mxu0 0.0
      %248 = vmatprep.subr.mxu0 0.0
      %249 = vmatpush1.msra.mxu0 0.0
      %250 = vmatprep.subr.mxu0 0.0
      %251 = vmatpush1.msra.mxu0 0.0
      %252 = vmatprep.subr.mxu0 0.0
      %253 = vmatpush1.msra.mxu0 0.0
      %254 = vmatprep.subr.mxu0 0.0
      %255 = vmatpush1.msra.mxu0 0.0
      %256 = vmatprep.subr.mxu0 0.0
      %257 = vmatpush1.msra.mxu0 0.0
      %258 = vmatprep.subr.mxu0 0.0
      %259 = vmatpush1.msra.mxu0 0.0
      %260 = vmatprep.subr.mxu0 0.0
      %261 = vmatpush1.msra.mxu0 0.0
      %262 = vmatprep.subr.mxu0 0.0
      %263 = vmatpush1.msra.mxu0 0.0
      %264 = vmatprep.subr.mxu0 0.0
      %265 = vmatpush1.msra.mxu0 0.0
      %266 = vmatprep.subr.mxu0 0.0
      %267 = vmatpush1.msra.mxu0 0.0
      %268 = vmatprep.mubr.f32.mxu0 0.0
      %269 = vmatmul.mubr.f32.gmra.mrb[0].mxu0 %v179
      %v270 = vpop.f32.mrb[0].mxu0
      %v271 = vadd.f32 %v202, %v270
      %v272 = vpop.f32.mrb[0].mxu0
      %273 = vmatprep.mubr.f32.mxu0 0.0
      %274 = vmatmul.mubr.f32.gmra.mrb[0].mxu0 %v180
      %v275 = vpop.f32.mrb[0].mxu0
      %v276 = vadd.f32 %v202, %v275
      %v277 = vpop.f32.mrb[0].mxu0
      %278 = vdwg.mxu0
      %279 = vst [vmem:[#allocation9] sm:$0xff] %v271
      %280 = vst [vmem:[#allocation9 + $0x8] sm:$0xff] %v276
    $region41: #{tpu_custom_call.1} parent=1 // pred_fallthru
      _
    // Predicated region
    $region42: #{tpu_custom_call.1} parent=1 // pred_check
      _
    $region43: #{tpu_custom_call.1} parent=1 // pred_check_branch
      %282 = sbr.rel (0) target = $region45
    $region44: #{tpu_custom_call.1} parent=1 // pred_region
      %s284 = ssub.s32 256, 256
      %285 = vsyncadd [#allocation5], %s284
      %s286 = sshll.u32 [#allocation9], 4
      %s287 = int_to_ptr.vmem [resolvable:$true] %s286
      %292 = dma.vmem_to_hbm [thread:$0]  %s287, 256, %s5, [#allocation5], 128, 128, 8
    $region45: #{tpu_custom_call.1} parent=1 // pred_fallthru
      _
    // Predicated region
    $region46: #{tpu_custom_call.1} parent=1 // pred_check
      _
    $region47: #{tpu_custom_call.1} parent=1 // pred_check_branch
      %294 = sbr.rel (0) target = $region49
    $region48: #{tpu_custom_call.1} parent=1 // pred_region
      %295 = dma.done [#allocation5], 256
    $region49: #{tpu_custom_call.1} parent=1 // pred_fallthru
      _
    %296 = vsyncpa [#allocation4], 1
    %297 = vsyncpa [#allocation7], 1
    %298 = vsyncpa [#allocation5], 1

// kernel: tpu_custom_call.1
$region0: #{tpu_custom_call.1}
  #allocation0 [shape = 'u32[]', space=smem, size = 0x4, offset = 0x4, fixed_abs, tag = 'smem constant byte address 0x4 - core index']
  #allocation1 [shape = 'u32[144,128]{1,0:T(1,128)}', space=vmem, size = 0x12000, scoped, tag = 'internal scratch']
  #allocation2 [shape = 'f32[16,128]{1,0:T(8,128)}', space=vmem, size = 0x2000, scoped, tag = 'scratch operand']
  %s0 = inlined_call_operand.hbm [shape: f32[16,128], index: 0, kind: input, shape index: {}]
  %s1 = inlined_call_operand.hbm [shape: f32[128,128], index: 1, kind: input, shape index: {}]
  %s2 = inlined_call_operand.vmem [shape: f32[1,128], index: 2, kind: input, shape index: {}]
  %s3 = inlined_call_operand.hbm [shape: f32[128,128], index: 3, kind: input, shape index: {}]
  %s4 = inlined_call_operand.vmem [shape: f32[1,128], index: 4, kind: input, shape index: {}]
  %s5 = inlined_call_operand.hbm [shape: f32[16,128], index: 5, kind: output, shape index: {}]
  %s6 = sld [smem:[#allocation0]]
  $region50: #{tpu_custom_call.1} parent=0
    _
  %s8 = ssub.s32 1, %s6
  %s9 = scalar_select 0, %s8, %s6
  $region1: #{tpu_custom_call.1} parent=0
    #allocation3 [shape = 'u8[8192]{0}', space=vmem, size = 0x2000, scoped, tag = 'input window, operand 0, single buffered']
    #allocation4 [shape = 's32[1]{0}', space=sflag, size = 0x4, scoped, tag = 'scoped memory for tpu_custom_call.1']
    #allocation5 [shape = 's32[1]{0}', space=sflag, size = 0x4, scoped, tag = 'scoped memory for tpu_custom_call.1']
    #allocation6 [shape = 'u8[65536]{0}', space=vmem, size = 0x10000, scoped, tag = 'input window, operand 1, single buffered']
    #allocation7 [shape = 's32[1]{0}', space=sflag, size = 0x4, scoped, tag = 'scoped memory for tpu_custom_call.1']
    #allocation8 [shape = 'u8[65536]{0}', space=vmem, size = 0x10000, scoped, tag = 'input window, operand 3, single buffered']
    #allocation9 [shape = 'u8[8192]{0}', space=vmem, size = 0x2000, scoped, tag = 'output window, operand 0, single buffered']
    %10 = vsyncpa [#allocation4], 0
    %11 = vsyncpa [#allocation7], 0
    %12 = vsyncpa [#allocation5], 0
    // Predicated region
    $region2: #{tpu_custom_call.1} parent=1 // pred_check
      _
    $region3: #{tpu_custom_call.1} parent=1 // pred_check_branch
      %14 = sbr.rel (0) target = $region5
    $region4: #{tpu_custom_call.1} parent=1 // pred_region
      %s16 = ssub.s32 256, 256
      %17 = vsyncadd [#allocation4], %s16
      %s18 = sshll.u32 [#allocation3], 4
      %s19 = int_to_ptr.vmem [resolvable:$true] %s18
      %24 = dma.hbm_to_vmem [thread:$0]  %s0, 256, %s19, [#allocation4], 128, 128, 8
    $region5: #{tpu_custom_call.1} parent=1 // pred_fallthru
      _
    // Predicated region
    $region6: #{tpu_custom_call.1} parent=1 // pred_check
      _
    $region7: #{tpu_custom_call.1} parent=1 // pred_check_branch
      %26 = sbr.rel (0) target = $region9
    $region8: #{tpu_custom_call.1} parent=1 // pred_region
      %s28 = ssub.s32 2048, 2048
      %29 = vsyncadd [#allocation7], %s28
      %s30 = sshll.u32 [#allocation6], 4
      %s31 = int_to_ptr.vmem [resolvable:$true] %s30
      %36 = dma.hbm_to_vmem [thread:$0]  %s1, 2048, %s31, [#allocation7], 128, 128, 8
    $region9: #{tpu_custom_call.1} parent=1 // pred_fallthru
      _
    // Predicated region
    $region10: #{tpu_custom_call.1} parent=1 // pred_check
      _
    $region11: #{tpu_custom_call.1} parent=1 // pred_check_branch
      %38 = sbr.rel (0) target = $region13
    $region12: #{tpu_custom_call.1} parent=1 // pred_region
      _
    $region13: #{tpu_custom_call.1} parent=1 // pred_fallthru
      _
    // Predicated region
    $region14: #{tpu_custom_call.1} parent=1 // pred_check
      _
    $region15: #{tpu_custom_call.1} parent=1 // pred_check_branch
      %40 = sbr.rel (0) target = $region17
    $region16: #{tpu_custom_call.1} parent=1 // pred_region
      %s42 = ssub.s32 2048, 2048
      %43 = vsyncadd [#allocation7], %s42
      %s44 = sshll.u32 [#allocation8], 4
      %s45 = int_to_ptr.vmem [resolvable:$true] %s44
      %50 = dma.hbm_to_vmem [thread:$0]  %s3, 2048, %s45, [#allocation7], 128, 128, 8
    $region17: #{tpu_custom_call.1} parent=1 // pred_fallthru
      _
    // Predicated region
    $region18: #{tpu_custom_call.1} parent=1 // pred_check
      _
    $region19: #{tpu_custom_call.1} parent=1 // pred_check_branch
      %52 = sbr.rel (0) target = $region21
    $region20: #{tpu_custom_call.1} parent=1 // pred_region
      _
    $region21: #{tpu_custom_call.1} parent=1 // pred_fallthru
      _
    // Predicated region
    $region22: #{tpu_custom_call.1} parent=1 // pred_check
      _
    $region23: #{tpu_custom_call.1} parent=1 // pred_check_branch
      %54 = sbr.rel (0) target = $region25
    $region24: #{tpu_custom_call.1} parent=1 // pred_region
      %55 = dma.done [#allocation4], 256
    $region25: #{tpu_custom_call.1} parent=1 // pred_fallthru
      _
    // Predicated region
    $region26: #{tpu_custom_call.1} parent=1 // pred_check
      _
    $region27: #{tpu_custom_call.1} parent=1 // pred_check_branch
      %57 = sbr.rel (0) target = $region29
    $region28: #{tpu_custom_call.1} parent=1 // pred_region
      %58 = dma.done [#allocation7], 2048
    $region29: #{tpu_custom_call.1} parent=1 // pred_fallthru
      _
    // Predicated region
    $region30: #{tpu_custom_call.1} parent=1 // pred_check
      _
    $region31: #{tpu_custom_call.1} parent=1 // pred_check_branch
      %60 = sbr.rel (0) target = $region33
    $region32: #{tpu_custom_call.1} parent=1 // pred_region
      %61 = dma.done [#allocation7], 2048
    $region33: #{tpu_custom_call.1} parent=1 // pred_fallthru
      _
    %p62 = scmp.eq.s32.totalorder 0, 0
    // Predicated region
    $region34: #{tpu_custom_call.1} parent=1 // pred_check
      %p63 = pneg %p62
    $region35: #{tpu_custom_call.1} parent=1 // pred_check_branch
      %65 = sbr.rel (%p63) target = $region37
    $region36: #{tpu_custom_call.1} parent=1 // pred_region
      %v66 = vld [vmem:[%s2] sm:$0x1]
      %v68 = vlaneseq
      %v69 = vshrl.u32 %v68, 7
      %v70 = vsub.s32 0, %v69
      %v71 = vrot.slane %v66, %v70
      %73 = vst [vmem:[#allocation2] sm:$0xff] %v71
      %74 = vst [vmem:[#allocation2 + $0x8] sm:$0xff] %v71
    $region37: #{tpu_custom_call.1} parent=1 // pred_fallthru
      _
    %v75 = vld [vmem:[#allocation2] sm:$0xff]
    %v76 = vld [vmem:[#allocation2 + $0x8] sm:$0xff]
    %v77 = vld [vmem:[#allocation3] sm:$0xff]
    %v78 = vld [vmem:[#allocation3 + $0x8] sm:$0xff]
    %v79 = vld [vmem:[#allocation6] sm:$0xff]
    %v80 = vld [vmem:[#allocation6 + $0x8] sm:$0xff]
    %v81 = vld [vmem:[#allocation6 + $0x10] sm:$0xff]
    %v82 = vld [vmem:[#allocation6 + $0x18] sm:$0xff]
    %v83 = vld [vmem:[#allocation6 + $0x20] sm:$0xff]
    %v84 = vld [vmem:[#allocation6 + $0x28] sm:$0xff]
    %v85 = vld [vmem:[#allocation6 + $0x30] sm:$0xff]
    %v86 = vld [vmem:[#allocation6 + $0x38] sm:$0xff]
    %v87 = vld [vmem:[#allocation6 + $0x40] sm:$0xff]
    %v88 = vld [vmem:[#allocation6 + $0x48] sm:$0xff]
    %v89 = vld [vmem:[#allocation6 + $0x50] sm:$0xff]
    %v90 = vld [vmem:[#allocation6 + $0x58] sm:$0xff]
    %v91 = vld [vmem:[#allocation6 + $0x60] sm:$0xff]
    %v92 = vld [vmem:[#allocation6 + $0x68] sm:$0xff]
    %v93 = vld [vmem:[#allocation6 + $0x70] sm:$0xff]
    %v94 = vld [vmem:[#allocation6 + $0x78] sm:$0xff]
    %95 = vmatprep.subr.mxu0 0.0
    %96 = vmatpush1.msra.mxu0 %v79
    %97 = vmatprep.subr.mxu0 0.0
    %98 = vmatpush1.msra.mxu0 %v80
    %99 = vmatprep.subr.mxu0 0.0
    %100 = vmatpush1.msra.mxu0 %v81
    %101 = vmatprep.subr.mxu0 0.0
    %102 = vmatpush1.msra.mxu0 %v82
    %103 = vmatprep.subr.mxu0 0.0
    %104 = vmatpush1.msra.mxu0 %v83
    %105 = vmatprep.subr.mxu0 0.0
    %106 = vmatpush1.msra.mxu0 %v84
    %107 = vmatprep.subr.mxu0 0.0
    %108 = vmatpush1.msra.mxu0 %v85
    %109 = vmatprep.subr.mxu0 0.0
    %110 = vmatpush1.msra.mxu0 %v86
    %111 = vmatprep.subr.mxu0 0.0
    %112 = vmatpush1.msra.mxu0 %v87
    %113 = vmatprep.subr.mxu0 0.0
    %114 = vmatpush1.msra.mxu0 %v88
    %115 = vmatprep.subr.mxu0 0.0
    %116 = vmatpush1.msra.mxu0 %v89
    %117 = vmatprep.subr.mxu0 0.0
    %118 = vmatpush1.msra.mxu0 %v90
    %119 = vmatprep.subr.mxu0 0.0
    %120 = vmatpush1.msra.mxu0 %v91
    %121 = vmatprep.subr.mxu0 0.0
    %122 = vmatpush1.msra.mxu0 %v92
    %123 = vmatprep.subr.mxu0 0.0
    %124 = vmatpush1.msra.mxu0 %v93
    %125 = vmatprep.subr.mxu0 0.0
    %126 = vmatpush1.msra.mxu0 %v94
    %127 = vmatprep.subr.mxu0 0.0
    %128 = vmatpush1.msra.mxu0 0.0
    %129 = vmatprep.subr.mxu0 0.0
    %130 = vmatpush1.msra.mxu0 0.0
    %131 = vmatprep.subr.mxu0 0.0
    %132 = vmatpush1.msra.mxu0 0.0
    %133 = vmatprep.subr.mxu0 0.0
    %134 = vmatpush1.msra.mxu0 0.0
    %135 = vmatprep.subr.mxu0 0.0
    %136 = vmatpush1.msra.mxu0 0.0
    %137 = vmatprep.subr.mxu0 0.0
    %138 = vmatpush1.msra.mxu0 0.0
    %139 = vmatprep.subr.mxu0 0.0
    %140 = vmatpush1.msra.mxu0 0.0
    %141 = vmatprep.subr.mxu0 0.0
    %142 = vmatpush1.msra.mxu0 0.0
    %143 = vmatprep.subr.mxu0 0.0
    %144 = vmatpush1.msra.mxu0 0.0
    %145 = vmatprep.subr.mxu0 0.0
    %146 = vmatpush1.msra.mxu0 0.0
    %147 = vmatprep.subr.mxu0 0.0
    %148 = vmatpush1.msra.mxu0 0.0
    %149 = vmatprep.subr.mxu0 0.0
    %150 = vmatpush1.msra.mxu0 0.0
    %151 = vmatprep.subr.mxu0 0.0
    %152 = vmatpush1.msra.mxu0 0.0
    %153 = vmatprep.subr.mxu0 0.0
    %154 = vmatpush1.msra.mxu0 0.0
    %155 = vmatprep.subr.mxu0 0.0
    %156 = vmatpush1.msra.mxu0 0.0
    %157 = vmatprep.subr.mxu0 0.0
    %158 = vmatpush1.msra.mxu0 0.0
    %159 = vmatprep.mubr.f32.mxu0 0.0
    %160 = vmatmul.mubr.f32.gmra.mrb[0].mxu0 %v77
    %v161 = vpop.f32.mrb[0].mxu0
    %v162 = vadd.f32 0.0, %v161
    %v163 = vpop.f32.mrb[0].mxu0
    %164 = vmatprep.mubr.f32.mxu0 0.0
    %165 = vmatmul.mubr.f32.gmra.mrb[0].mxu0 %v78
    %v166 = vpop.f32.mrb[0].mxu0
    %v167 = vadd.f32 0.0, %v166
    %v168 = vpop.f32.mrb[0].mxu0
    %169 = vdwg.mxu0
    %v170 = vadd.f32 %v75, %v162
    %v171 = vadd.f32 %v76, %v167
    %172 = vst [vmem:[#allocation2] sm:$0xff] %v170
    %173 = vst [vmem:[#allocation2 + $0x8] sm:$0xff] %v171
    // Predicated region
    $region38: #{tpu_custom_call.1} parent=1 // pred_check
      %p174 = pneg %p62
    $region39: #{tpu_custom_call.1} parent=1 // pred_check_branch
      %176 = sbr.rel (%p174) target = $region41
    $region40: #{tpu_custom_call.1} parent=1 // pred_region
      %v177 = vld [vmem:[#allocation2] sm:$0xff]
      %v178 = vld [vmem:[#allocation2 + $0x8] sm:$0xff]
      %v179 = vmax.f32 %v177, 0.0
      %v180 = vmax.f32 %v178, 0.0
      %v181 = vld [vmem:[#allocation8] sm:$0xff]
      %v182 = vld [vmem:[#allocation8 + $0x8] sm:$0xff]
      %v183 = vld [vmem:[#allocation8 + $0x10] sm:$0xff]
      %v184 = vld [vmem:[#allocation8 + $0x18] sm:$0xff]
      %v185 = vld [vmem:[#allocation8 + $0x20] sm:$0xff]
      %v186 = vld [vmem:[#allocation8 + $0x28] sm:$0xff]
      %v187 = vld [vmem:[#allocation8 + $0x30] sm:$0xff]
      %v188 = vld [vmem:[#allocation8 + $0x38] sm:$0xff]
      %v189 = vld [vmem:[#allocation8 + $0x40] sm:$0xff]
      %v190 = vld [vmem:[#allocation8 + $0x48] sm:$0xff]
      %v191 = vld [vmem:[#allocation8 + $0x50] sm:$0xff]
      %v192 = vld [vmem:[#allocation8 + $0x58] sm:$0xff]
      %v193 = vld [vmem:[#allocation8 + $0x60] sm:$0xff]
      %v194 = vld [vmem:[#allocation8 + $0x68] sm:$0xff]
      %v195 = vld [vmem:[#allocation8 + $0x70] sm:$0xff]
      %v196 = vld [vmem:[#allocation8 + $0x78] sm:$0xff]
      %v197 = vld [vmem:[%s4] sm:$0x1]
      %v199 = vlaneseq
      %v200 = vshrl.u32 %v199, 7
      %v201 = vsub.s32 0, %v200
      %v202 = vrot.slane %v197, %v201
      %204 = vmatprep.subr.mxu0 0.0
      %205 = vmatpush1.msra.mxu0 %v181
      %206 = vmatprep.subr.mxu0 0.0
      %207 = vmatpush1.msra.mxu0 %v182
      %208 = vmatprep.subr.mxu0 0.0
      %209 = vmatpush1.msra.mxu0 %v183
      %210 = vmatprep.subr.mxu0 0.0
      %211 = vmatpush1.msra.mxu0 %v184
      %212 = vmatprep.subr.mxu0 0.0
      %213 = vmatpush1.msra.mxu0 %v185
      %214 = vmatprep.subr.mxu0 0.0
      %215 = vmatpush1.msra.mxu0 %v186
      %216 = vmatprep.subr.mxu0 0.0
      %217 = vmatpush1.msra.mxu0 %v187
      %218 = vmatprep.subr.mxu0 0.0
      %219 = vmatpush1.msra.mxu0 %v188
      %220 = vmatprep.subr.mxu0 0.0
      %221 = vmatpush1.msra.mxu0 %v189
      %222 = vmatprep.subr.mxu0 0.0
      %223 = vmatpush1.msra.mxu0 %v190
      %224 = vmatprep.subr.mxu0 0.0
      %225 = vmatpush1.msra.mxu0 %v191
      %226 = vmatprep.subr.mxu0 0.0
      %227 = vmatpush1.msra.mxu0 %v192
      %228 = vmatprep.subr.mxu0 0.0
      %229 = vmatpush1.msra.mxu0 %v193
      %230 = vmatprep.subr.mxu0 0.0
      %231 = vmatpush1.msra.mxu0 %v194
      %232 = vmatprep.subr.mxu0 0.0
      %233 = vmatpush1.msra.mxu0 %v195
      %234 = vmatprep.subr.mxu0 0.0
      %235 = vmatpush1.msra.mxu0 %v196
      %236 = vmatprep.subr.mxu0 0.0
      %237 = vmatpush1.msra.mxu0 0.0
      %238 = vmatprep.subr.mxu0 0.0
      %239 = vmatpush1.msra.mxu0 0.0
      %240 = vmatprep.subr.mxu0 0.0
      %241 = vmatpush1.msra.mxu0 0.0
      %242 = vmatprep.subr.mxu0 0.0
      %243 = vmatpush1.msra.mxu0 0.0
      %244 = vmatprep.subr.mxu0 0.0
      %245 = vmatpush1.msra.mxu0 0.0
      %246 = vmatprep.subr.mxu0 0.0
      %247 = vmatpush1.msra.mxu0 0.0
      %248 = vmatprep.subr.mxu0 0.0
      %249 = vmatpush1.msra.mxu0 0.0
      %250 = vmatprep.subr.mxu0 0.0
      %251 = vmatpush1.msra.mxu0 0.0
      %252 = vmatprep.subr.mxu0 0.0
      %253 = vmatpush1.msra.mxu0 0.0
      %254 = vmatprep.subr.mxu0 0.0
      %255 = vmatpush1.msra.mxu0 0.0
      %256 = vmatprep.subr.mxu0 0.0
      %257 = vmatpush1.msra.mxu0 0.0
      %258 = vmatprep.subr.mxu0 0.0
      %259 = vmatpush1.msra.mxu0 0.0
      %260 = vmatprep.subr.mxu0 0.0
      %261 = vmatpush1.msra.mxu0 0.0
      %262 = vmatprep.subr.mxu0 0.0
      %263 = vmatpush1.msra.mxu0 0.0
      %264 = vmatprep.subr.mxu0 0.0
      %265 = vmatpush1.msra.mxu0 0.0
      %266 = vmatprep.subr.mxu0 0.0
      %267 = vmatpush1.msra.mxu0 0.0
      %268 = vmatprep.mubr.f32.mxu0 0.0
      %269 = vmatmul.mubr.f32.gmra.mrb[0].mxu0 %v179
      %v270 = vpop.f32.mrb[0].mxu0
      %v271 = vadd.f32 %v202, %v270
      %v272 = vpop.f32.mrb[0].mxu0
      %273 = vmatprep.mubr.f32.mxu0 0.0
      %274 = vmatmul.mubr.f32.gmra.mrb[0].mxu0 %v180
      %v275 = vpop.f32.mrb[0].mxu0
      %v276 = vadd.f32 %v202, %v275
      %v277 = vpop.f32.mrb[0].mxu0
      %278 = vdwg.mxu0
      %279 = vst [vmem:[#allocation9] sm:$0xff] %v271
      %280 = vst [vmem:[#allocation9 + $0x8] sm:$0xff] %v276
    $region41: #{tpu_custom_call.1} parent=1 // pred_fallthru
      _
    // Predicated region
    $region42: #{tpu_custom_call.1} parent=1 // pred_check
      _
    $region43: #{tpu_custom_call.1} parent=1 // pred_check_branch
      %282 = sbr.rel (0) target = $region45
    $region44: #{tpu_custom_call.1} parent=1 // pred_region
      %s284 = ssub.s32 256, 256
      %285 = vsyncadd [#allocation5], %s284
      %s286 = sshll.u32 [#allocation9], 4
      %s287 = int_to_ptr.vmem [resolvable:$true] %s286
      %292 = dma.vmem_to_hbm [thread:$0]  %s287, 256, %s5, [#allocation5], 128, 128, 8
    $region45: #{tpu_custom_call.1} parent=1 // pred_fallthru
      _
    // Predicated region
    $region46: #{tpu_custom_call.1} parent=1 // pred_check
      _
    $region47: #{tpu_custom_call.1} parent=1 // pred_check_branch
      %294 = sbr.rel (0) target = $region49
    $region48: #{tpu_custom_call.1} parent=1 // pred_region
      %295 = dma.done [#allocation5], 256
    $region49: #{tpu_custom_call.1} parent=1 // pred_fallthru
      _
    %296 = vsyncpa [#allocation4], 1
    %297 = vsyncpa [#allocation7], 1
    %298 = vsyncpa [#allocation5], 1

</llo_original>
